<compile_context>
chip_gen: v6e
topology: v6e:2x2x1
jax: 0.10.0
libtpu: 0.0.40
codegen_flags: <defaults>
</compile_context>

<pallas_src>
import functools
import math

import jax
import jax.numpy as jnp
from jax import lax
from jax.experimental import pallas as pl
from jax.experimental.pallas import tpu as pltpu

FEATS = 32    # feature dim of each node embedding
N = 64        # number of nodes
K = 8         # top-k
T_BLK = 64    # timesteps per grid step (vreg-pressure sweet spot per review)


# ---------------------------------------------------------------------------
# Fused kernel: scores -> iterative top-k (+ pad-with-last-valid) -> MXU gather
# ---------------------------------------------------------------------------
def _topk_block_kernel(x_ref, w_ref, m_ref, o_ref, *, k: int):
    """Fused TopK for one block of timesteps.

    x_ref: (Tb, N, F)  node embeddings in their natural layout (no transpose).
    w_ref: (1, F)      pre-normalized scorer (scorer / ||scorer||).
    m_ref: (Tb, N)     additive mask (0 = live node, -inf = masked).
    o_ref: (Tb, K, F)  out[t] == node_embs[topk_idx] * tanh(scores[topk_idx]).
    """
    x = x_ref[...]                       # (Tb, N, F) f32
    w = w_ref[...]                       # (1, F)
    msk = m_ref[...]                     # (Tb, N)

    tb, n, f = x.shape
    neg_inf = jnp.float32(-jnp.inf)

    # scores[t, n] = <x[t, n, :], w_hat> + mask[t, n]
    # VPU broadcast-multiply + lane reduce; result is lane-dense (Tb, N).
    scores = jnp.sum(x * w[None, :, :], axis=-1) + msk                   # (Tb, N)

    lane_iota = lax.broadcasted_iota(jnp.int32, (1, n), 1).astype(jnp.float32)
    col_iota = lax.broadcasted_iota(jnp.int32, (1, k), 1).astype(jnp.float32)

    sel_idx = jnp.zeros((tb, k), jnp.float32)    # selected node index per slot
    sel_val = jnp.zeros((tb, k), jnp.float32)    # selected (masked) score per slot

    eff_idx = None
    eff_val = None
    remaining = scores
    for j in range(k):                           # k is small & static -> unrolled
        # argmax with lowest-index tie-break (matches lax.top_k / torch.topk),
        # vectorized over all Tb timestep rows at once.
        m_j = jnp.max(remaining, axis=-1, keepdims=True)                 # (Tb, 1)
        cand = jnp.where(remaining == m_j, lane_iota, jnp.float32(n))
        idx_j = jnp.min(cand, axis=-1, keepdims=True)                    # (Tb, 1)

        if j == 0:
            eff_idx, eff_val = idx_j, m_j
        else:
            valid = m_j > neg_inf                 # -inf => fewer than k live nodes
            eff_idx = jnp.where(valid, idx_j, eff_idx)   # pad_with_last_val
            eff_val = jnp.where(valid, m_j, eff_val)

        # NaN-safe slot write: where-based (no (-inf) * 0 products when a
        # timestep has zero live nodes).
        col_j = col_iota == jnp.float32(j)                               # (1, K)
        sel_idx = jnp.where(col_j, eff_idx, sel_idx)                     # (Tb, K)
        sel_val = jnp.where(col_j, eff_val, sel_val)

        # Knock out the raw selection for the next iteration.
        remaining = jnp.where(lane_iota == idx_j, neg_inf, remaining)

    # One-hot selection matrix H and a single batched matmul gather on the MXU
    # (replaces 8 cross-lane XLU reductions per timestep).
    hot = (sel_idx[:, :, None] == lane_iota[None, :, :]).astype(jnp.float32)
    gathered = jnp.einsum(
        'tkn,tnf->tkf', hot, x,
        preferred_element_type=jnp.float32,
        precision=lax.Precision.HIGHEST)                                 # (Tb, K, F)

    # tanh on the EUP; clamp so an all-masked timestep (sel_val == -inf) hits
    # the saturated branch instead of a potential inf/inf in the tanh formula.
    scale = jnp.tanh(jnp.maximum(sel_val, jnp.float32(-40.0)))           # (Tb, K)
    o_ref[...] = gathered * scale[:, :, None]


def _topk_pallas(x_t, w_hat, mask_t, k, t_blk):
    """x_t: (T, N, F), w_hat: (1, F), mask_t: (T, N) -> (T, K, F).  T % t_blk == 0."""
    t, n, f = x_t.shape
    kernel = functools.partial(_topk_block_kernel, k=k)
    return pl.pallas_call(
        kernel,
        out_shape=jax.ShapeDtypeStruct((t, k, f), jnp.float32),
        grid=(t // t_blk,),
        in_specs=[
            pl.BlockSpec((t_blk, n, f), lambda i: (i, 0, 0)),
            pl.BlockSpec((1, f), lambda i: (0, 0)),
            pl.BlockSpec((t_blk, n), lambda i: (i, 0)),
        ],
        out_specs=pl.BlockSpec((t_blk, k, f), lambda i: (i, 0, 0)),
        compiler_params=pltpu.CompilerParams(
            dimension_semantics=("parallel",)),   # T-blocks across v7x's 2 TCs
    )(x_t, w_hat, mask_t)


# ---------------------------------------------------------------------------
# Public wrappers
# ---------------------------------------------------------------------------
def _normalized_scorer(scorer):
    # Grid-invariant: hoisted out of the kernel (review item: no per-step norm).
    return (scorer / jnp.linalg.norm(scorer)).reshape(1, -1)            # (1, F)


@jax.jit
def topk_forward_batched(node_embs_t, scorer, mask_t):
    """Batched over timesteps.

    node_embs_t (T, N, FEATS), scorer (FEATS, 1), mask_t (T, N, 1) -> (T, K, FEATS);
    out[t] equals the PyTorch module's per-timestep result before its final .t().
    """
    t, n, f = node_embs_t.shape
    w_hat = _normalized_scorer(scorer)
    m = mask_t.reshape(t, n)
    t_blk = min(T_BLK, t)
    pad = (-t) % t_blk
    if pad:  # pad to a multiple of the block; padded rows are sliced off below
        node_embs_t = jnp.pad(node_embs_t, ((0, pad), (0, 0), (0, 0)))
        m = jnp.pad(m, ((0, pad), (0, 0)))
    out = _topk_pallas(node_embs_t, w_hat, m, K, t_blk)
    return out[:t]


@jax.jit
def topk_forward(node_embs, scorer, mask):
    """Module-shaped call: node_embs (N, FEATS), scorer (FEATS, 1), mask (N, 1)
    -> (FEATS, K) == PyTorch `out.t()`."""
    out = topk_forward_batched(node_embs[None], scorer, mask[None])[0]   # (K, F)
    return out.T                                                          # tiny


# ---------------------------------------------------------------------------
# Pure-JAX reference of the same semantics
# ---------------------------------------------------------------------------
def _reference(node_embs, scorer, mask, k):
    scores = jnp.sum(node_embs * scorer.reshape(1, -1), axis=-1, keepdims=True)
    scores = scores / jnp.linalg.norm(scorer) + mask
    vals, idx = lax.top_k(scores.reshape(-1), k)
    valid = vals > -jnp.inf
    nvalid = jnp.sum(valid.astype(jnp.int32))
    last = idx[jnp.maximum(nvalid - 1, 0)]
    idx = jnp.where(valid, idx, last)
    out = node_embs[idx] * jnp.tanh(scores[idx].reshape(-1, 1))
    return out.T                                                          # (F, K)


if __name__ == "__main__":
    key = jax.random.PRNGKey(0)
    k_emb, k_scorer, k_embt, k_mask = jax.random.split(key, 4)

    # reset_param: U(-1/sqrt(feats), 1/sqrt(feats))
    stdv = 1.0 / math.sqrt(FEATS)
    scorer = jax.random.uniform(
        k_scorer, (FEATS, 1), jnp.float32, minval=-stdv, maxval=stdv)

    # --- single-timestep, module-shaped call (4 masked nodes) --------------
    node_embs = jax.random.normal(k_emb, (N, FEATS), dtype=jnp.float32)
    mask0 = jnp.zeros((N, 1), jnp.float32).at[N - 4:, :].set(-jnp.inf)

    out = topk_forward(node_embs, scorer, mask0)
    jax.block_until_ready(out)
    ref = _reference(node_embs, scorer, mask0, K)
    assert out.shape == (FEATS, K), out.shape
    assert jnp.allclose(out, ref, atol=1e-5, rtol=1e-5), "single-call mismatch"

    # --- batched call: T=67 -> padding + 2 grid blocks + edge-case masks ----
    T = 67
    embs_t = jax.random.normal(k_embt, (T, N, FEATS), dtype=jnp.float32)
    rand_mask = jnp.where(jax.random.uniform(k_mask, (T, N, 1)) < 0.25,
                          -jnp.inf, 0.0).astype(jnp.float32)
    # t=0: normal mask; t=1: only 5 live nodes (pad_with_last_val path);
    # t=2: all nodes masked (degenerate path, NaN guard).
    mask_t = rand_mask.at[0].set(mask0)
    mask_t = mask_t.at[1].set(
        jnp.full((N, 1), -jnp.inf, jnp.float32).at[:5, :].set(0.0))
    mask_t = mask_t.at[2].set(jnp.full((N, 1), -jnp.inf, jnp.float32))

    out_t = topk_forward_batched(embs_t, scorer, mask_t)
    jax.block_until_ready(out_t)
    ref_t = jax.vmap(lambda e, m: _reference(e, scorer, m, K).T)(embs_t, mask_t)
    assert out_t.shape == (T, K, FEATS), out_t.shape
    assert jnp.isfinite(out_t).all(), "NaN/Inf in batched output"
    assert jnp.allclose(out_t, ref_t, atol=1e-5, rtol=1e-5), "batched mismatch"

    print("KERNEL_OK")
</pallas_src>

<mosaic_0001>
module attributes {stable_mosaic.version = 11 : i64} {
  func.func @_topk_block_kernel(%arg0: i32, %arg1: memref<1x64x32xf32, #tpu.memory_space<vmem>>, %arg2: memref<1x32xf32, #tpu.memory_space<vmem>>, %arg3: memref<1x64xf32, #tpu.memory_space<vmem>>, %arg4: memref<1x8x32xf32, #tpu.memory_space<vmem>>) attributes {dimension_semantics = [#tpu.dimension_semantics<parallel>], iteration_bounds = array<i64: 1>, scalar_prefetch = 0 : i64, scratch_operands = 0 : i64, tpu.core_type = #tpu.core_type<tc>, window_params = [{transform_indices = @transform_0, window_bounds = array<i64: 1, 64, 32>}, {pipeline_mode = #tpu.pipeline_mode<synchronous>, transform_indices = @transform_1, window_bounds = array<i64: 1, 32>}, {transform_indices = @transform_2, window_bounds = array<i64: 1, 64>}, {transform_indices = @transform_3, window_bounds = array<i64: 1, 8, 32>}]} {
    %c0 = arith.constant 0 : index
    %c0_0 = arith.constant 0 : index
    %c0_1 = arith.constant 0 : index
    %0 = vector.load %arg1[%c0, %c0_0, %c0_1] : memref<1x64x32xf32, #tpu.memory_space<vmem>>, vector<1x64x32xf32>
    %c0_2 = arith.constant 0 : index
    %c0_3 = arith.constant 0 : index
    %1 = vector.load %arg2[%c0_2, %c0_3] : memref<1x32xf32, #tpu.memory_space<vmem>>, vector<1x32xf32>
    %c0_4 = arith.constant 0 : index
    %c0_5 = arith.constant 0 : index
    %2 = vector.load %arg3[%c0_4, %c0_5] : memref<1x64xf32, #tpu.memory_space<vmem>>, vector<1x64xf32>
    %3 = vector.shape_cast %1 : vector<1x32xf32> to vector<1x1x32xf32>
    %4 = vector.broadcast %3 : vector<1x1x32xf32> to vector<1x64x32xf32>
    %5 = arith.mulf %0, %4 : vector<1x64x32xf32>
    %cst = arith.constant dense<0.000000e+00> : vector<1x64xf32>
    %6 = vector.multi_reduction <add>, %5, %cst [2] : vector<1x64x32xf32> to vector<1x64xf32>
    %7 = arith.addf %6, %2 : vector<1x64xf32>
    %8 = tpu.iota {dimensions = array<i32: 1>} : vector<1x64xi32>
    %9 = arith.sitofp %8 : vector<1x64xi32> to vector<1x64xf32>
    %10 = tpu.iota {dimensions = array<i32: 1>} : vector<1x8xi32>
    %11 = arith.sitofp %10 : vector<1x8xi32> to vector<1x8xf32>
    %cst_6 = arith.constant 0.000000e+00 : f32
    %12 = vector.broadcast %cst_6 : f32 to vector<1x8xf32>
    %cst_7 = arith.constant 0.000000e+00 : f32
    %13 = vector.broadcast %cst_7 : f32 to vector<1x8xf32>
    %cst_8 = arith.constant dense<0xFF800000> : vector<1xf32>
    %14 = vector.multi_reduction <maximumf>, %7, %cst_8 [1] : vector<1x64xf32> to vector<1xf32>
    %15 = vector.shape_cast %14 : vector<1xf32> to vector<1x1xf32>
    %16 = vector.broadcast %15 : vector<1x1xf32> to vector<1x64xf32>
    %17 = arith.cmpf oeq, %7, %16 : vector<1x64xf32>
    %cst_9 = arith.constant 6.400000e+01 : f32
    %18 = vector.broadcast %cst_9 : f32 to vector<1x64xf32>
    %19 = arith.select %17, %9, %18 : vector<1x64xi1>, vector<1x64xf32>
    %cst_10 = arith.constant dense<0x7F800000> : vector<1xf32>
    %20 = vector.multi_reduction <minimumf>, %19, %cst_10 [1] : vector<1x64xf32> to vector<1xf32>
    %21 = vector.shape_cast %20 : vector<1xf32> to vector<1x1xf32>
    %cst_11 = arith.constant 0.000000e+00 : f32
    %22 = vector.broadcast %cst_11 : f32 to vector<1x8xf32>
    %23 = arith.cmpf oeq, %11, %22 : vector<1x8xf32>
    %24 = vector.shape_cast %21 : vector<1x1xf32> to vector<1x1xf32>
    %25 = vector.broadcast %24 : vector<1x1xf32> to vector<1x8xf32>
    %26 = arith.select %23, %25, %12 : vector<1x8xi1>, vector<1x8xf32>
    %27 = vector.shape_cast %15 : vector<1x1xf32> to vector<1x1xf32>
    %28 = vector.broadcast %27 : vector<1x1xf32> to vector<1x8xf32>
    %29 = arith.select %23, %28, %13 : vector<1x8xi1>, vector<1x8xf32>
    %30 = vector.broadcast %21 : vector<1x1xf32> to vector<1x64xf32>
    %31 = arith.cmpf oeq, %9, %30 : vector<1x64xf32>
    %cst_12 = arith.constant 0xFF800000 : f32
    %32 = vector.broadcast %cst_12 : f32 to vector<1x64xf32>
    %33 = arith.select %31, %32, %7 : vector<1x64xi1>, vector<1x64xf32>
    %cst_13 = arith.constant dense<0xFF800000> : vector<1xf32>
    %34 = vector.multi_reduction <maximumf>, %33, %cst_13 [1] : vector<1x64xf32> to vector<1xf32>
    %35 = vector.shape_cast %34 : vector<1xf32> to vector<1x1xf32>
    %36 = vector.broadcast %35 : vector<1x1xf32> to vector<1x64xf32>
    %37 = arith.cmpf oeq, %33, %36 : vector<1x64xf32>
    %cst_14 = arith.constant 6.400000e+01 : f32
    %38 = vector.broadcast %cst_14 : f32 to vector<1x64xf32>
    %39 = arith.select %37, %9, %38 : vector<1x64xi1>, vector<1x64xf32>
    %cst_15 = arith.constant dense<0x7F800000> : vector<1xf32>
    %40 = vector.multi_reduction <minimumf>, %39, %cst_15 [1] : vector<1x64xf32> to vector<1xf32>
    %41 = vector.shape_cast %40 : vector<1xf32> to vector<1x1xf32>
    %cst_16 = arith.constant 0xFF800000 : f32
    %42 = vector.broadcast %cst_16 : f32 to vector<1x1xf32>
    %43 = arith.cmpf ogt, %35, %42 : vector<1x1xf32>
    %44 = arith.select %43, %41, %21 : vector<1x1xi1>, vector<1x1xf32>
    %45 = arith.select %43, %35, %15 : vector<1x1xi1>, vector<1x1xf32>
    %cst_17 = arith.constant 1.000000e+00 : f32
    %46 = vector.broadcast %cst_17 : f32 to vector<1x8xf32>
    %47 = arith.cmpf oeq, %11, %46 : vector<1x8xf32>
    %48 = vector.shape_cast %44 : vector<1x1xf32> to vector<1x1xf32>
    %49 = vector.broadcast %48 : vector<1x1xf32> to vector<1x8xf32>
    %50 = arith.select %47, %49, %26 : vector<1x8xi1>, vector<1x8xf32>
    %51 = vector.shape_cast %45 : vector<1x1xf32> to vector<1x1xf32>
    %52 = vector.broadcast %51 : vector<1x1xf32> to vector<1x8xf32>
    %53 = arith.select %47, %52, %29 : vector<1x8xi1>, vector<1x8xf32>
    %54 = vector.broadcast %41 : vector<1x1xf32> to vector<1x64xf32>
    %55 = arith.cmpf oeq, %9, %54 : vector<1x64xf32>
    %cst_18 = arith.constant 0xFF800000 : f32
    %56 = vector.broadcast %cst_18 : f32 to vector<1x64xf32>
    %57 = arith.select %55, %56, %33 : vector<1x64xi1>, vector<1x64xf32>
    %cst_19 = arith.constant dense<0xFF800000> : vector<1xf32>
    %58 = vector.multi_reduction <maximumf>, %57, %cst_19 [1] : vector<1x64xf32> to vector<1xf32>
    %59 = vector.shape_cast %58 : vector<1xf32> to vector<1x1xf32>
    %60 = vector.broadcast %59 : vector<1x1xf32> to vector<1x64xf32>
    %61 = arith.cmpf oeq, %57, %60 : vector<1x64xf32>
    %cst_20 = arith.constant 6.400000e+01 : f32
    %62 = vector.broadcast %cst_20 : f32 to vector<1x64xf32>
    %63 = arith.select %61, %9, %62 : vector<1x64xi1>, vector<1x64xf32>
    %cst_21 = arith.constant dense<0x7F800000> : vector<1xf32>
    %64 = vector.multi_reduction <minimumf>, %63, %cst_21 [1] : vector<1x64xf32> to vector<1xf32>
    %65 = vector.shape_cast %64 : vector<1xf32> to vector<1x1xf32>
    %cst_22 = arith.constant 0xFF800000 : f32
    %66 = vector.broadcast %cst_22 : f32 to vector<1x1xf32>
    %67 = arith.cmpf ogt, %59, %66 : vector<1x1xf32>
    %68 = arith.select %67, %65, %44 : vector<1x1xi1>, vector<1x1xf32>
    %69 = arith.select %67, %59, %45 : vector<1x1xi1>, vector<1x1xf32>
    %cst_23 = arith.constant 2.000000e+00 : f32
    %70 = vector.broadcast %cst_23 : f32 to vector<1x8xf32>
    %71 = arith.cmpf oeq, %11, %70 : vector<1x8xf32>
    %72 = vector.shape_cast %68 : vector<1x1xf32> to vector<1x1xf32>
    %73 = vector.broadcast %72 : vector<1x1xf32> to vector<1x8xf32>
    %74 = arith.select %71, %73, %50 : vector<1x8xi1>, vector<1x8xf32>
    %75 = vector.shape_cast %69 : vector<1x1xf32> to vector<1x1xf32>
    %76 = vector.broadcast %75 : vector<1x1xf32> to vector<1x8xf32>
    %77 = arith.select %71, %76, %53 : vector<1x8xi1>, vector<1x8xf32>
    %78 = vector.broadcast %65 : vector<1x1xf32> to vector<1x64xf32>
    %79 = arith.cmpf oeq, %9, %78 : vector<1x64xf32>
    %cst_24 = arith.constant 0xFF800000 : f32
    %80 = vector.broadcast %cst_24 : f32 to vector<1x64xf32>
    %81 = arith.select %79, %80, %57 : vector<1x64xi1>, vector<1x64xf32>
    %cst_25 = arith.constant dense<0xFF800000> : vector<1xf32>
    %82 = vector.multi_reduction <maximumf>, %81, %cst_25 [1] : vector<1x64xf32> to vector<1xf32>
    %83 = vector.shape_cast %82 : vector<1xf32> to vector<1x1xf32>
    %84 = vector.broadcast %83 : vector<1x1xf32> to vector<1x64xf32>
    %85 = arith.cmpf oeq, %81, %84 : vector<1x64xf32>
    %cst_26 = arith.constant 6.400000e+01 : f32
    %86 = vector.broadcast %cst_26 : f32 to vector<1x64xf32>
    %87 = arith.select %85, %9, %86 : vector<1x64xi1>, vector<1x64xf32>
    %cst_27 = arith.constant dense<0x7F800000> : vector<1xf32>
    %88 = vector.multi_reduction <minimumf>, %87, %cst_27 [1] : vector<1x64xf32> to vector<1xf32>
    %89 = vector.shape_cast %88 : vector<1xf32> to vector<1x1xf32>
    %cst_28 = arith.constant 0xFF800000 : f32
    %90 = vector.broadcast %cst_28 : f32 to vector<1x1xf32>
    %91 = arith.cmpf ogt, %83, %90 : vector<1x1xf32>
    %92 = arith.select %91, %89, %68 : vector<1x1xi1>, vector<1x1xf32>
    %93 = arith.select %91, %83, %69 : vector<1x1xi1>, vector<1x1xf32>
    %cst_29 = arith.constant 3.000000e+00 : f32
    %94 = vector.broadcast %cst_29 : f32 to vector<1x8xf32>
    %95 = arith.cmpf oeq, %11, %94 : vector<1x8xf32>
    %96 = vector.shape_cast %92 : vector<1x1xf32> to vector<1x1xf32>
    %97 = vector.broadcast %96 : vector<1x1xf32> to vector<1x8xf32>
    %98 = arith.select %95, %97, %74 : vector<1x8xi1>, vector<1x8xf32>
    %99 = vector.shape_cast %93 : vector<1x1xf32> to vector<1x1xf32>
    %100 = vector.broadcast %99 : vector<1x1xf32> to vector<1x8xf32>
    %101 = arith.select %95, %100, %77 : vector<1x8xi1>, vector<1x8xf32>
    %102 = vector.broadcast %89 : vector<1x1xf32> to vector<1x64xf32>
    %103 = arith.cmpf oeq, %9, %102 : vector<1x64xf32>
    %cst_30 = arith.constant 0xFF800000 : f32
    %104 = vector.broadcast %cst_30 : f32 to vector<1x64xf32>
    %105 = arith.select %103, %104, %81 : vector<1x64xi1>, vector<1x64xf32>
    %cst_31 = arith.constant dense<0xFF800000> : vector<1xf32>
    %106 = vector.multi_reduction <maximumf>, %105, %cst_31 [1] : vector<1x64xf32> to vector<1xf32>
    %107 = vector.shape_cast %106 : vector<1xf32> to vector<1x1xf32>
    %108 = vector.broadcast %107 : vector<1x1xf32> to vector<1x64xf32>
    %109 = arith.cmpf oeq, %105, %108 : vector<1x64xf32>
    %cst_32 = arith.constant 6.400000e+01 : f32
    %110 = vector.broadcast %cst_32 : f32 to vector<1x64xf32>
    %111 = arith.select %109, %9, %110 : vector<1x64xi1>, vector<1x64xf32>
    %cst_33 = arith.constant dense<0x7F800000> : vector<1xf32>
    %112 = vector.multi_reduction <minimumf>, %111, %cst_33 [1] : vector<1x64xf32> to vector<1xf32>
    %113 = vector.shape_cast %112 : vector<1xf32> to vector<1x1xf32>
    %cst_34 = arith.constant 0xFF800000 : f32
    %114 = vector.broadcast %cst_34 : f32 to vector<1x1xf32>
    %115 = arith.cmpf ogt, %107, %114 : vector<1x1xf32>
    %116 = arith.select %115, %113, %92 : vector<1x1xi1>, vector<1x1xf32>
    %117 = arith.select %115, %107, %93 : vector<1x1xi1>, vector<1x1xf32>
    %cst_35 = arith.constant 4.000000e+00 : f32
    %118 = vector.broadcast %cst_35 : f32 to vector<1x8xf32>
    %119 = arith.cmpf oeq, %11, %118 : vector<1x8xf32>
    %120 = vector.shape_cast %116 : vector<1x1xf32> to vector<1x1xf32>
    %121 = vector.broadcast %120 : vector<1x1xf32> to vector<1x8xf32>
    %122 = arith.select %119, %121, %98 : vector<1x8xi1>, vector<1x8xf32>
    %123 = vector.shape_cast %117 : vector<1x1xf32> to vector<1x1xf32>
    %124 = vector.broadcast %123 : vector<1x1xf32> to vector<1x8xf32>
    %125 = arith.select %119, %124, %101 : vector<1x8xi1>, vector<1x8xf32>
    %126 = vector.broadcast %113 : vector<1x1xf32> to vector<1x64xf32>
    %127 = arith.cmpf oeq, %9, %126 : vector<1x64xf32>
    %cst_36 = arith.constant 0xFF800000 : f32
    %128 = vector.broadcast %cst_36 : f32 to vector<1x64xf32>
    %129 = arith.select %127, %128, %105 : vector<1x64xi1>, vector<1x64xf32>
    %cst_37 = arith.constant dense<0xFF800000> : vector<1xf32>
    %130 = vector.multi_reduction <maximumf>, %129, %cst_37 [1] : vector<1x64xf32> to vector<1xf32>
    %131 = vector.shape_cast %130 : vector<1xf32> to vector<1x1xf32>
    %132 = vector.broadcast %131 : vector<1x1xf32> to vector<1x64xf32>
    %133 = arith.cmpf oeq, %129, %132 : vector<1x64xf32>
    %cst_38 = arith.constant 6.400000e+01 : f32
    %134 = vector.broadcast %cst_38 : f32 to vector<1x64xf32>
    %135 = arith.select %133, %9, %134 : vector<1x64xi1>, vector<1x64xf32>
    %cst_39 = arith.constant dense<0x7F800000> : vector<1xf32>
    %136 = vector.multi_reduction <minimumf>, %135, %cst_39 [1] : vector<1x64xf32> to vector<1xf32>
    %137 = vector.shape_cast %136 : vector<1xf32> to vector<1x1xf32>
    %cst_40 = arith.constant 0xFF800000 : f32
    %138 = vector.broadcast %cst_40 : f32 to vector<1x1xf32>
    %139 = arith.cmpf ogt, %131, %138 : vector<1x1xf32>
    %140 = arith.select %139, %137, %116 : vector<1x1xi1>, vector<1x1xf32>
    %141 = arith.select %139, %131, %117 : vector<1x1xi1>, vector<1x1xf32>
    %cst_41 = arith.constant 5.000000e+00 : f32
    %142 = vector.broadcast %cst_41 : f32 to vector<1x8xf32>
    %143 = arith.cmpf oeq, %11, %142 : vector<1x8xf32>
    %144 = vector.shape_cast %140 : vector<1x1xf32> to vector<1x1xf32>
    %145 = vector.broadcast %144 : vector<1x1xf32> to vector<1x8xf32>
    %146 = arith.select %143, %145, %122 : vector<1x8xi1>, vector<1x8xf32>
    %147 = vector.shape_cast %141 : vector<1x1xf32> to vector<1x1xf32>
    %148 = vector.broadcast %147 : vector<1x1xf32> to vector<1x8xf32>
    %149 = arith.select %143, %148, %125 : vector<1x8xi1>, vector<1x8xf32>
    %150 = vector.broadcast %137 : vector<1x1xf32> to vector<1x64xf32>
    %151 = arith.cmpf oeq, %9, %150 : vector<1x64xf32>
    %cst_42 = arith.constant 0xFF800000 : f32
    %152 = vector.broadcast %cst_42 : f32 to vector<1x64xf32>
    %153 = arith.select %151, %152, %129 : vector<1x64xi1>, vector<1x64xf32>
    %cst_43 = arith.constant dense<0xFF800000> : vector<1xf32>
    %154 = vector.multi_reduction <maximumf>, %153, %cst_43 [1] : vector<1x64xf32> to vector<1xf32>
    %155 = vector.shape_cast %154 : vector<1xf32> to vector<1x1xf32>
    %156 = vector.broadcast %155 : vector<1x1xf32> to vector<1x64xf32>
    %157 = arith.cmpf oeq, %153, %156 : vector<1x64xf32>
    %cst_44 = arith.constant 6.400000e+01 : f32
    %158 = vector.broadcast %cst_44 : f32 to vector<1x64xf32>
    %159 = arith.select %157, %9, %158 : vector<1x64xi1>, vector<1x64xf32>
    %cst_45 = arith.constant dense<0x7F800000> : vector<1xf32>
    %160 = vector.multi_reduction <minimumf>, %159, %cst_45 [1] : vector<1x64xf32> to vector<1xf32>
    %161 = vector.shape_cast %160 : vector<1xf32> to vector<1x1xf32>
    %cst_46 = arith.constant 0xFF800000 : f32
    %162 = vector.broadcast %cst_46 : f32 to vector<1x1xf32>
    %163 = arith.cmpf ogt, %155, %162 : vector<1x1xf32>
    %164 = arith.select %163, %161, %140 : vector<1x1xi1>, vector<1x1xf32>
    %165 = arith.select %163, %155, %141 : vector<1x1xi1>, vector<1x1xf32>
    %cst_47 = arith.constant 6.000000e+00 : f32
    %166 = vector.broadcast %cst_47 : f32 to vector<1x8xf32>
    %167 = arith.cmpf oeq, %11, %166 : vector<1x8xf32>
    %168 = vector.shape_cast %164 : vector<1x1xf32> to vector<1x1xf32>
    %169 = vector.broadcast %168 : vector<1x1xf32> to vector<1x8xf32>
    %170 = arith.select %167, %169, %146 : vector<1x8xi1>, vector<1x8xf32>
    %171 = vector.shape_cast %165 : vector<1x1xf32> to vector<1x1xf32>
    %172 = vector.broadcast %171 : vector<1x1xf32> to vector<1x8xf32>
    %173 = arith.select %167, %172, %149 : vector<1x8xi1>, vector<1x8xf32>
    %174 = vector.broadcast %161 : vector<1x1xf32> to vector<1x64xf32>
    %175 = arith.cmpf oeq, %9, %174 : vector<1x64xf32>
    %cst_48 = arith.constant 0xFF800000 : f32
    %176 = vector.broadcast %cst_48 : f32 to vector<1x64xf32>
    %177 = arith.select %175, %176, %153 : vector<1x64xi1>, vector<1x64xf32>
    %cst_49 = arith.constant dense<0xFF800000> : vector<1xf32>
    %178 = vector.multi_reduction <maximumf>, %177, %cst_49 [1] : vector<1x64xf32> to vector<1xf32>
    %179 = vector.shape_cast %178 : vector<1xf32> to vector<1x1xf32>
    %180 = vector.broadcast %179 : vector<1x1xf32> to vector<1x64xf32>
    %181 = arith.cmpf oeq, %177, %180 : vector<1x64xf32>
    %cst_50 = arith.constant 6.400000e+01 : f32
    %182 = vector.broadcast %cst_50 : f32 to vector<1x64xf32>
    %183 = arith.select %181, %9, %182 : vector<1x64xi1>, vector<1x64xf32>
    %cst_51 = arith.constant dense<0x7F800000> : vector<1xf32>
    %184 = vector.multi_reduction <minimumf>, %183, %cst_51 [1] : vector<1x64xf32> to vector<1xf32>
    %185 = vector.shape_cast %184 : vector<1xf32> to vector<1x1xf32>
    %cst_52 = arith.constant 0xFF800000 : f32
    %186 = vector.broadcast %cst_52 : f32 to vector<1x1xf32>
    %187 = arith.cmpf ogt, %179, %186 : vector<1x1xf32>
    %188 = arith.select %187, %185, %164 : vector<1x1xi1>, vector<1x1xf32>
    %189 = arith.select %187, %179, %165 : vector<1x1xi1>, vector<1x1xf32>
    %cst_53 = arith.constant 7.000000e+00 : f32
    %190 = vector.broadcast %cst_53 : f32 to vector<1x8xf32>
    %191 = arith.cmpf oeq, %11, %190 : vector<1x8xf32>
    %192 = vector.shape_cast %188 : vector<1x1xf32> to vector<1x1xf32>
    %193 = vector.broadcast %192 : vector<1x1xf32> to vector<1x8xf32>
    %194 = arith.select %191, %193, %170 : vector<1x8xi1>, vector<1x8xf32>
    %195 = vector.shape_cast %189 : vector<1x1xf32> to vector<1x1xf32>
    %196 = vector.broadcast %195 : vector<1x1xf32> to vector<1x8xf32>
    %197 = arith.select %191, %196, %173 : vector<1x8xi1>, vector<1x8xf32>
    %198 = vector.shape_cast %194 : vector<1x8xf32> to vector<1x8x1xf32>
    %199 = vector.shape_cast %9 : vector<1x64xf32> to vector<1x1x64xf32>
    %200 = vector.broadcast %198 : vector<1x8x1xf32> to vector<1x8x64xf32>
    %201 = vector.broadcast %199 : vector<1x1x64xf32> to vector<1x8x64xf32>
    %202 = arith.cmpf oeq, %200, %201 : vector<1x8x64xf32>
    %203 = arith.extui %202 : vector<1x8x64xi1> to vector<1x8x64xi32>
    %204 = arith.sitofp %203 : vector<1x8x64xi32> to vector<1x8x64xf32>
    "tpu.trace_start"() <{level = 10 : i32, message = "tkn,tnf->tkf"}> : () -> ()
    %cst_54 = arith.constant dense<0.000000e+00> : vector<1x8x32xf32>
    %205 = tpu.matmul %204, %0, %cst_54 {dimension_numbers = #tpu.dot_dimension_numbers<[2], [1], [1], [2], [0, 0, 0, 1, 1, 2], [0], [0]>, precision = #tpu.contract_precision<fp32>} : vector<1x8x64xf32>, vector<1x64x32xf32>, vector<1x8x32xf32> -> vector<1x8x32xf32>
    "tpu.trace_stop"() : () -> ()
    %cst_55 = arith.constant -4.000000e+01 : f32
    %206 = vector.broadcast %cst_55 : f32 to vector<1x8xf32>
    %207 = arith.maximumf %197, %206 : vector<1x8xf32>
    %208 = math.tanh %207 : vector<1x8xf32>
    %209 = vector.shape_cast %208 : vector<1x8xf32> to vector<1x8x1xf32>
    %210 = vector.broadcast %209 : vector<1x8x1xf32> to vector<1x8x32xf32>
    %211 = arith.mulf %205, %210 : vector<1x8x32xf32>
    %c0_56 = arith.constant 0 : index
    %c0_57 = arith.constant 0 : index
    %c0_58 = arith.constant 0 : index
    %212 = vector.load %arg4[%c0_56, %c0_57, %c0_58] : memref<1x8x32xf32, #tpu.memory_space<vmem>>, vector<1x8x32xf32>
    tpu.vector_store %arg4[%c0_56, %c0_57, %c0_58], %211 {strides = array<i32>} : memref<1x8x32xf32, #tpu.memory_space<vmem>>, vector<1x8x32xf32>,
    return
  }
  func.func @transform_0(%arg0: i32) -> (i32, i32, i32) {
    %c0_i32 = arith.constant 0 : i32
    %c0_i32_0 = arith.constant 0 : i32
    %c0_i32_1 = arith.constant 0 : i32
    return %arg0, %c0_i32, %c0_i32_0 : i32, i32, i32
  }
  func.func @transform_1(%arg0: i32) -> (i32, i32) {
    %c0_i32 = arith.constant 0 : i32
    %c0_i32_0 = arith.constant 0 : i32
    %c0_i32_1 = arith.constant 0 : i32
    return %c0_i32, %c0_i32_0 : i32, i32
  }
  func.func @transform_2(%arg0: i32) -> (i32, i32) {
    %c0_i32 = arith.constant 0 : i32
    %c0_i32_0 = arith.constant 0 : i32
    return %arg0, %c0_i32 : i32, i32
  }
  func.func @transform_3(%arg0: i32) -> (i32, i32, i32) {
    %c0_i32 = arith.constant 0 : i32
    %c0_i32_0 = arith.constant 0 : i32
    %c0_i32_1 = arith.constant 0 : i32
    return %arg0, %c0_i32, %c0_i32_0 : i32, i32, i32
  }
}

</mosaic_0001>

<llo_original>
// kernel: topk_forward_batched.1
$region0: #{topk_forward_batched.1}
  #allocation0 [shape = 'u32[]', space=smem, size = 0x4, offset = 0x4, fixed_abs, tag = 'smem constant byte address 0x4 - core index']
  #allocation1 [shape = 'u32[144,128]{1,0:T(1,128)}', space=vmem, size = 0x12000, scoped, tag = 'internal scratch']
  %s0 = inlined_call_operand.vmem [shape: f32[1,64,32], index: 0, kind: input, shape index: {}]
  %s1 = inlined_call_operand.vmem [shape: f32[1,32], index: 1, kind: input, shape index: {}]
  %s2 = inlined_call_operand.vmem [shape: f32[1,64], index: 2, kind: input, shape index: {}]
  %s3 = inlined_call_operand.hbm [shape: f32[1,8,32], index: 3, kind: output, shape index: {}]
  %s4 = sld [smem:[#allocation0]]
  $region22: #{topk_forward_batched.1} parent=0
    _
  %s6 = ssub.s32 1, %s4
  %s7 = scalar_select 0, %s6, %s4
  $region1: #{topk_forward_batched.1} parent=0
    #allocation2 [shape = 'u8[4096]{0}', space=vmem, size = 0x1000, scoped, tag = 'output window, operand 0, single buffered']
    #allocation3 [shape = 's32[1]{0}', space=sflag, size = 0x4, scoped, tag = 'scoped memory for topk_forward_batched.1']
    %8 = vsyncpa [#allocation3], 0
    // Predicated region
    $region2: #{topk_forward_batched.1} parent=1 // pred_check
      _
    $region3: #{topk_forward_batched.1} parent=1 // pred_check_branch
      %10 = sbr.rel (0) target = $region5
    $region4: #{topk_forward_batched.1} parent=1 // pred_region
      _
    $region5: #{topk_forward_batched.1} parent=1 // pred_fallthru
      _
    // Predicated region
    $region6: #{topk_forward_batched.1} parent=1 // pred_check
      _
    $region7: #{topk_forward_batched.1} parent=1 // pred_check_branch
      %12 = sbr.rel (0) target = $region9
    $region8: #{topk_forward_batched.1} parent=1 // pred_region
      _
    $region9: #{topk_forward_batched.1} parent=1 // pred_fallthru
      _
    // Predicated region
    $region10: #{topk_forward_batched.1} parent=1 // pred_check
      _
    $region11: #{topk_forward_batched.1} parent=1 // pred_check_branch
      %14 = sbr.rel (0) target = $region13
    $region12: #{topk_forward_batched.1} parent=1 // pred_region
      _
    $region13: #{topk_forward_batched.1} parent=1 // pred_fallthru
      _
    %v15 = vld [vmem:[%s0] sm:$0xff]
    %v16 = vld [vmem:[%s0 + $0x8] sm:$0xff]
    %v17 = vld [vmem:[%s0 + $0x10] sm:$0xff]
    %v18 = vld [vmem:[%s0 + $0x18] sm:$0xff]
    %v19 = vld [vmem:[%s0 + $0x20] sm:$0xff]
    %v20 = vld [vmem:[%s0 + $0x28] sm:$0xff]
    %v21 = vld [vmem:[%s0 + $0x30] sm:$0xff]
    %v22 = vld [vmem:[%s0 + $0x38] sm:$0xff]
    %v23 = vld [vmem:[%s1] sm:$0x1]
    %v24 = vld [vmem:[%s2] sm:$0x1]
    %v26 = vlaneseq
    %v27 = vshrl.u32 %v26, 7
    %v28 = vsub.s32 0, %v27
    %v29 = vrot.slane %v23, %v28
    %v31 = vmul.f32 %v15, %v29
    %v32 = vmul.f32 %v16, %v29
    %v33 = vmul.f32 %v17, %v29
    %v34 = vmul.f32 %v18, %v29
    %v35 = vmul.f32 %v19, %v29
    %v36 = vmul.f32 %v20, %v29
    %v37 = vmul.f32 %v21, %v29
    %v38 = vmul.f32 %v22, %v29
    %vm39 = vcmask 261120
    %v40 = vsel %vm39, %v31, 0.0
    %41 = vadd.xlane.f32.xlu0 %v40
    %v42 = vpop.xlane.xlu0 %41
    %v43 = vsel %vm39, %v32, 0.0
    %44 = vadd.xlane.f32.xlu0 %v43
    %v45 = vpop.xlane.xlu0 %44
    %v46 = vsel %vm39, %v33, 0.0
    %47 = vadd.xlane.f32.xlu0 %v46
    %v48 = vpop.xlane.xlu0 %47
    %v49 = vsel %vm39, %v34, 0.0
    %50 = vadd.xlane.f32.xlu0 %v49
    %v51 = vpop.xlane.xlu0 %50
    %v52 = vsel %vm39, %v35, 0.0
    %53 = vadd.xlane.f32.xlu0 %v52
    %v54 = vpop.xlane.xlu0 %53
    %v55 = vsel %vm39, %v36, 0.0
    %56 = vadd.xlane.f32.xlu0 %v55
    %v57 = vpop.xlane.xlu0 %56
    %v58 = vsel %vm39, %v37, 0.0
    %59 = vadd.xlane.f32.xlu0 %v58
    %v60 = vpop.xlane.xlu0 %59
    %v61 = vsel %vm39, %v38, 0.0
    %62 = vadd.xlane.f32.xlu0 %v61
    %v63 = vpop.xlane.xlu0 %62
    %v65 = vlaneseq
    %v66 = vshrl.u32 %v65, 7
    %v67 = vsub.s32 0, %v66
    %v68 = vrot.slane %v24, %v67
    %70 = vbcast.lane.b32.xlu0 %v68, 256
    %v71 = vpop.permute.xlu0 %70
    %s73 = sor.u32 256, 8
    %74 = vbcast.lane.b32.xlu0 %v68, %s73
    %v75 = vpop.permute.xlu0 %74
    %s77 = sor.u32 256, 16
    %78 = vbcast.lane.b32.xlu0 %v68, %s77
    %v79 = vpop.permute.xlu0 %78
    %s81 = sor.u32 256, 24
    %82 = vbcast.lane.b32.xlu0 %v68, %s81
    %v83 = vpop.permute.xlu0 %82
    %s85 = sor.u32 256, 32
    %86 = vbcast.lane.b32.xlu0 %v68, %s85
    %v87 = vpop.permute.xlu0 %86
    %s89 = sor.u32 256, 40
    %90 = vbcast.lane.b32.xlu0 %v68, %s89
    %v91 = vpop.permute.xlu0 %90
    %s93 = sor.u32 256, 48
    %94 = vbcast.lane.b32.xlu0 %v68, %s93
    %v95 = vpop.permute.xlu0 %94
    %s97 = sor.u32 256, 56
    %98 = vbcast.lane.b32.xlu0 %v68, %s97
    %v99 = vpop.permute.xlu0 %98
    %v108 = vadd.f32 %v42, %v71
    %v109 = vadd.f32 %v45, %v75
    %v110 = vadd.f32 %v48, %v79
    %v111 = vadd.f32 %v51, %v83
    %v112 = vadd.f32 %v54, %v87
    %v113 = vadd.f32 %v57, %v91
    %v114 = vadd.f32 %v60, %v95
    %v115 = vadd.f32 %v63, %v99
    %v116 = vlaneseq
    %v117 = vand.u32 %v116, 127
    %v118 = vcvt.s32.f32 %v117
    %vm119 = vcmask 7168
    %v120 = vsel %vm119, %v108, -inf
    %v121 = vsel %vm119, %v109, -inf
    %v122 = vsel %vm119, %v110, -inf
    %v123 = vsel %vm119, %v111, -inf
    %v124 = vsel %vm119, %v112, -inf
    %v125 = vmax.f32 %v120, %v124
    %v126 = vsel %vm119, %v113, -inf
    %v127 = vmax.f32 %v121, %v126
    %v128 = vsel %vm119, %v114, -inf
    %v129 = vmax.f32 %v122, %v128
    %v130 = vsel %vm119, %v115, -inf
    %v131 = vmax.f32 %v123, %v130
    %v132 = vmax.f32 %v125, %v127
    %v133 = vmax.f32 %v129, %v131
    %v134 = vmax.f32 %v132, %v133
    %v135 = vrot.slane %v134, 4
    %v136 = vmax.f32 %v134, %v135
    %v137 = vrot.slane %v136, 2
    %v138 = vmax.f32 %v136, %v137
    %v139 = vrot.slane %v138, 1
    %v140 = vmax.f32 %v138, %v139
    %142 = vset.pattern.permute.xlu0 0
    %143 = vperm.xlu0 %142, %v140
    %v144 = vpop.permute.xlu0 %143
    %vm146 = vcmp.eq.f32.partialorder %v108, %v144
    %vm147 = vcmp.eq.f32.partialorder %v109, %v144
    %vm148 = vcmp.eq.f32.partialorder %v110, %v144
    %vm149 = vcmp.eq.f32.partialorder %v111, %v144
    %vm150 = vcmp.eq.f32.partialorder %v112, %v144
    %vm151 = vcmp.eq.f32.partialorder %v113, %v144
    %vm152 = vcmp.eq.f32.partialorder %v114, %v144
    %vm153 = vcmp.eq.f32.partialorder %v115, %v144
    %156 = vbcast.lane.b32.xlu0 %v118, 256
    %v157 = vpop.permute.xlu0 %156
    %s159 = sor.u32 256, 8
    %160 = vbcast.lane.b32.xlu0 %v118, %s159
    %v161 = vpop.permute.xlu0 %160
    %s163 = sor.u32 256, 16
    %164 = vbcast.lane.b32.xlu0 %v118, %s163
    %v165 = vpop.permute.xlu0 %164
    %s167 = sor.u32 256, 24
    %168 = vbcast.lane.b32.xlu0 %v118, %s167
    %v169 = vpop.permute.xlu0 %168
    %s171 = sor.u32 256, 32
    %172 = vbcast.lane.b32.xlu0 %v118, %s171
    %v173 = vpop.permute.xlu0 %172
    %s175 = sor.u32 256, 40
    %176 = vbcast.lane.b32.xlu0 %v118, %s175
    %v177 = vpop.permute.xlu0 %176
    %s179 = sor.u32 256, 48
    %180 = vbcast.lane.b32.xlu0 %v118, %s179
    %v181 = vpop.permute.xlu0 %180
    %s183 = sor.u32 256, 56
    %184 = vbcast.lane.b32.xlu0 %v118, %s183
    %v185 = vpop.permute.xlu0 %184
    %v194 = vsel %vm146, %v157, 64.0
    %v195 = vsel %vm147, %v161, 64.0
    %v196 = vsel %vm148, %v165, 64.0
    %v197 = vsel %vm149, %v169, 64.0
    %v198 = vsel %vm150, %v173, 64.0
    %v199 = vsel %vm151, %v177, 64.0
    %v200 = vsel %vm152, %v181, 64.0
    %v201 = vsel %vm153, %v185, 64.0
    %v202 = vsel %vm119, %v194, inf
    %v203 = vsel %vm119, %v195, inf
    %v204 = vsel %vm119, %v196, inf
    %v205 = vsel %vm119, %v197, inf
    %v206 = vsel %vm119, %v198, inf
    %v207 = vmin.f32 %v202, %v206
    %v208 = vsel %vm119, %v199, inf
    %v209 = vmin.f32 %v203, %v208
    %v210 = vsel %vm119, %v200, inf
    %v211 = vmin.f32 %v204, %v210
    %v212 = vsel %vm119, %v201, inf
    %v213 = vmin.f32 %v205, %v212
    %v214 = vmin.f32 %v207, %v209
    %v215 = vmin.f32 %v211, %v213
    %v216 = vmin.f32 %v214, %v215
    %v217 = vrot.slane %v216, 4
    %v218 = vmin.f32 %v216, %v217
    %v219 = vrot.slane %v218, 2
    %v220 = vmin.f32 %v218, %v219
    %v221 = vrot.slane %v220, 1
    %v222 = vmin.f32 %v220, %v221
    %vm223 = vcmp.eq.f32.partialorder %v118, 0.0
    %225 = vset.pattern.permute.xlu0 0
    %226 = vperm.xlu0 %225, %v222
    %v227 = vpop.permute.xlu0 %226
    %v229 = vsel %vm223, %v227, 0.0
    %v230 = vsel %vm223, %v144, 0.0
    %vm231 = vcmp.eq.f32.partialorder %v118, %v227
    %240 = vset.pattern.permute.xlu0 0
    %241 = vperm.xlu0 %240, %v108
    %v242 = vpop.permute.xlu0 %241
    %243 = vset.pattern.permute.xlu0 0
    %244 = vperm.xlu0 %243, %v109
    %v245 = vpop.permute.xlu0 %244
    %246 = vset.pattern.permute.xlu0 0
    %247 = vperm.xlu0 %246, %v110
    %v248 = vpop.permute.xlu0 %247
    %249 = vset.pattern.permute.xlu0 0
    %250 = vperm.xlu0 %249, %v111
    %v251 = vpop.permute.xlu0 %250
    %252 = vset.pattern.permute.xlu0 0
    %253 = vperm.xlu0 %252, %v112
    %v254 = vpop.permute.xlu0 %253
    %255 = vset.pattern.permute.xlu0 0
    %256 = vperm.xlu0 %255, %v113
    %v257 = vpop.permute.xlu0 %256
    %258 = vset.pattern.permute.xlu0 0
    %259 = vperm.xlu0 %258, %v114
    %v260 = vpop.permute.xlu0 %259
    %261 = vset.pattern.permute.xlu0 0
    %262 = vperm.xlu0 %261, %v115
    %v263 = vpop.permute.xlu0 %262
    %v264 = vlaneseq
    %v265 = vshrl.u32 %v264, 7
    %v266 = vsub.s32 %v117, %v265
    %v267 = vrot.slane %v242, %v266
    %v268 = vadd.s32 %v117, 4294967288
    %v269 = vlaneseq
    %v270 = vshrl.u32 %v269, 7
    %v271 = vsub.s32 %v268, %v270
    %v272 = vrot.slane %v245, %v271
    %vm273 = vcmask 130112
    %v274 = vsel %vm273, %v272, %v267
    %v275 = vadd.s32 %v117, 4294967280
    %v276 = vlaneseq
    %v277 = vshrl.u32 %v276, 7
    %v278 = vsub.s32 %v275, %v277
    %v279 = vrot.slane %v248, %v278
    %vm280 = vcmask 195712
    %v281 = vsel %vm280, %v279, %v274
    %v282 = vadd.s32 %v117, 4294967272
    %v283 = vlaneseq
    %v284 = vshrl.u32 %v283, 7
    %v285 = vsub.s32 %v282, %v284
    %v286 = vrot.slane %v251, %v285
    %vm287 = vcmask 261312
    %v288 = vsel %vm287, %v286, %v281
    %v289 = vadd.s32 %v117, 4294967264
    %v290 = vlaneseq
    %v291 = vshrl.u32 %v290, 7
    %v292 = vsub.s32 %v289, %v291
    %v293 = vrot.slane %v254, %v292
    %vm294 = vcmask 326912
    %v295 = vsel %vm294, %v293, %v288
    %v296 = vadd.s32 %v117, 4294967256
    %v297 = vlaneseq
    %v298 = vshrl.u32 %v297, 7
    %v299 = vsub.s32 %v296, %v298
    %v300 = vrot.slane %v257, %v299
    %vm301 = vcmask 392512
    %v302 = vsel %vm301, %v300, %v295
    %v303 = vadd.s32 %v117, 4294967248
    %v304 = vlaneseq
    %v305 = vshrl.u32 %v304, 7
    %v306 = vsub.s32 %v303, %v305
    %v307 = vrot.slane %v260, %v306
    %vm308 = vcmask 458112
    %v309 = vsel %vm308, %v307, %v302
    %v310 = vadd.s32 %v117, 4294967240
    %v311 = vlaneseq
    %v312 = vshrl.u32 %v311, 7
    %v313 = vsub.s32 %v310, %v312
    %v314 = vrot.slane %v263, %v313
    %vm315 = vcmask 523712
    %v316 = vsel %vm315, %v314, %v309
    %v318 = vsel %vm231, -inf, %v316
    %vm319 = vcmask 516096
    %v320 = vsel %vm319, %v318, -inf
    %321 = vmax.xlane.f32.xlu0 %v320
    %v322 = vpop.xlane.xlu0 %321
    %vm323 = vcmp.eq.f32.partialorder %v318, %v322
    %v324 = vsel %vm323, %v118, 64.0
    %v325 = vsel %vm319, %v324, inf
    %326 = vmin.xlane.f32.xlu0 %v325
    %v327 = vpop.xlane.xlu0 %326
    %vm328 = vcmp.gt.f32.partialorder %v322, -inf
    %v329 = vsel %vm328, %v327, %v222
    %v330 = vsel %vm328, %v322, %v140
    %vm331 = vcmp.eq.f32.partialorder %v118, 1.0
    %333 = vset.pattern.permute.xlu0 0
    %334 = vperm.xlu0 %333, %v329
    %v335 = vpop.permute.xlu0 %334
    %v337 = vsel %vm331, %v335, %v229
    %339 = vset.pattern.permute.xlu0 0
    %340 = vperm.xlu0 %339, %v330
    %v341 = vpop.permute.xlu0 %340
    %v343 = vsel %vm331, %v341, %v230
    %vm344 = vcmp.eq.f32.partialorder %v118, %v327
    %v345 = vsel %vm344, -inf, %v318
    %v346 = vsel %vm319, %v345, -inf
    %347 = vmax.xlane.f32.xlu0 %v346
    %v348 = vpop.xlane.xlu0 %347
    %vm349 = vcmp.eq.f32.partialorder %v345, %v348
    %v350 = vsel %vm349, %v118, 64.0
    %v351 = vsel %vm319, %v350, inf
    %352 = vmin.xlane.f32.xlu0 %v351
    %v353 = vpop.xlane.xlu0 %352
    %vm354 = vcmp.gt.f32.partialorder %v348, -inf
    %v355 = vsel %vm354, %v353, %v329
    %v356 = vsel %vm354, %v348, %v330
    %vm357 = vcmp.eq.f32.partialorder %v118, 2.0
    %359 = vset.pattern.permute.xlu0 0
    %360 = vperm.xlu0 %359, %v355
    %v361 = vpop.permute.xlu0 %360
    %v363 = vsel %vm357, %v361, %v337
    %365 = vset.pattern.permute.xlu0 0
    %366 = vperm.xlu0 %365, %v356
    %v367 = vpop.permute.xlu0 %366
    %v369 = vsel %vm357, %v367, %v343
    %vm370 = vcmp.eq.f32.partialorder %v118, %v353
    %v371 = vsel %vm370, -inf, %v345
    %v372 = vsel %vm319, %v371, -inf
    %373 = vmax.xlane.f32.xlu0 %v372
    %v374 = vpop.xlane.xlu0 %373
    %vm375 = vcmp.eq.f32.partialorder %v371, %v374
    %v376 = vsel %vm375, %v118, 64.0
    %v377 = vsel %vm319, %v376, inf
    %378 = vmin.xlane.f32.xlu0 %v377
    %v379 = vpop.xlane.xlu0 %378
    %vm380 = vcmp.gt.f32.partialorder %v374, -inf
    %v381 = vsel %vm380, %v379, %v355
    %v382 = vsel %vm380, %v374, %v356
    %vm383 = vcmp.eq.f32.partialorder %v118, 3.0
    %385 = vset.pattern.permute.xlu0 0
    %386 = vperm.xlu0 %385, %v381
    %v387 = vpop.permute.xlu0 %386
    %v389 = vsel %vm383, %v387, %v363
    %391 = vset.pattern.permute.xlu0 0
    %392 = vperm.xlu0 %391, %v382
    %v393 = vpop.permute.xlu0 %392
    %v395 = vsel %vm383, %v393, %v369
    %vm396 = vcmp.eq.f32.partialorder %v118, %v379
    %v397 = vsel %vm396, -inf, %v371
    %v398 = vsel %vm319, %v397, -inf
    %399 = vmax.xlane.f32.xlu0 %v398
    %v400 = vpop.xlane.xlu0 %399
    %vm401 = vcmp.eq.f32.partialorder %v397, %v400
    %v402 = vsel %vm401, %v118, 64.0
    %v403 = vsel %vm319, %v402, inf
    %404 = vmin.xlane.f32.xlu0 %v403
    %v405 = vpop.xlane.xlu0 %404
    %vm406 = vcmp.gt.f32.partialorder %v400, -inf
    %v407 = vsel %vm406, %v405, %v381
    %v408 = vsel %vm406, %v400, %v382
    %vm409 = vcmp.eq.f32.partialorder %v118, 4.0
    %411 = vset.pattern.permute.xlu0 0
    %412 = vperm.xlu0 %411, %v407
    %v413 = vpop.permute.xlu0 %412
    %v415 = vsel %vm409, %v413, %v389
    %417 = vset.pattern.permute.xlu0 0
    %418 = vperm.xlu0 %417, %v408
    %v419 = vpop.permute.xlu0 %418
    %v421 = vsel %vm409, %v419, %v395
    %vm422 = vcmp.eq.f32.partialorder %v118, %v405
    %v423 = vsel %vm422, -inf, %v397
    %v424 = vsel %vm319, %v423, -inf
    %425 = vmax.xlane.f32.xlu0 %v424
    %v426 = vpop.xlane.xlu0 %425
    %vm427 = vcmp.eq.f32.partialorder %v423, %v426
    %v428 = vsel %vm427, %v118, 64.0
    %v429 = vsel %vm319, %v428, inf
    %430 = vmin.xlane.f32.xlu0 %v429
    %v431 = vpop.xlane.xlu0 %430
    %vm432 = vcmp.gt.f32.partialorder %v426, -inf
    %v433 = vsel %vm432, %v431, %v407
    %v434 = vsel %vm432, %v426, %v408
    %vm435 = vcmp.eq.f32.partialorder %v118, 5.0
    %437 = vset.pattern.permute.xlu0 0
    %438 = vperm.xlu0 %437, %v433
    %v439 = vpop.permute.xlu0 %438
    %v441 = vsel %vm435, %v439, %v415
    %443 = vset.pattern.permute.xlu0 0
    %444 = vperm.xlu0 %443, %v434
    %v445 = vpop.permute.xlu0 %444
    %v447 = vsel %vm435, %v445, %v421
    %vm448 = vcmp.eq.f32.partialorder %v118, %v431
    %v449 = vsel %vm448, -inf, %v423
    %v450 = vsel %vm319, %v449, -inf
    %451 = vmax.xlane.f32.xlu0 %v450
    %v452 = vpop.xlane.xlu0 %451
    %vm453 = vcmp.eq.f32.partialorder %v449, %v452
    %v454 = vsel %vm453, %v118, 64.0
    %v455 = vsel %vm319, %v454, inf
    %456 = vmin.xlane.f32.xlu0 %v455
    %v457 = vpop.xlane.xlu0 %456
    %vm458 = vcmp.gt.f32.partialorder %v452, -inf
    %v459 = vsel %vm458, %v457, %v433
    %v460 = vsel %vm458, %v452, %v434
    %vm461 = vcmp.eq.f32.partialorder %v118, 6.0
    %463 = vset.pattern.permute.xlu0 0
    %464 = vperm.xlu0 %463, %v459
    %v465 = vpop.permute.xlu0 %464
    %v467 = vsel %vm461, %v465, %v441
    %469 = vset.pattern.permute.xlu0 0
    %470 = vperm.xlu0 %469, %v460
    %v471 = vpop.permute.xlu0 %470
    %v473 = vsel %vm461, %v471, %v447
    %vm474 = vcmp.eq.f32.partialorder %v118, %v457
    %v475 = vsel %vm474, -inf, %v449
    %v476 = vsel %vm319, %v475, -inf
    %477 = vmax.xlane.f32.xlu0 %v476
    %v478 = vpop.xlane.xlu0 %477
    %vm479 = vcmp.eq.f32.partialorder %v475, %v478
    %v480 = vsel %vm479, %v118, 64.0
    %v481 = vsel %vm319, %v480, inf
    %482 = vmin.xlane.f32.xlu0 %v481
    %v483 = vpop.xlane.xlu0 %482
    %vm484 = vcmp.gt.f32.partialorder %v478, -inf
    %v485 = vsel %vm484, %v483, %v459
    %v486 = vsel %vm484, %v478, %v460
    %vm487 = vcmp.eq.f32.partialorder %v118, 7.0
    %489 = vset.pattern.permute.xlu0 0
    %490 = vperm.xlu0 %489, %v485
    %v491 = vpop.permute.xlu0 %490
    %v493 = vsel %vm487, %v491, %v467
    %495 = vset.pattern.permute.xlu0 0
    %496 = vperm.xlu0 %495, %v486
    %v497 = vpop.permute.xlu0 %496
    %v499 = vsel %vm487, %v497, %v473
    %v500 = vlaneseq
    %v501 = vshrl.u32 %v500, 7
    %v502 = vsub.s32 0, %v501
    %v503 = vrot.slane %v493, %v502
    %505 = vbcast.lane.b32.xlu0 %v503, 256
    %v506 = vpop.permute.xlu0 %505
    %vm507 = vcmp.eq.f32.partialorder %v506, %v118
    %v508 = vsel %vm507, 1, 0
    %v509 = vcvt.s32.f32 %v508
    %vm510 = vcmask 523264
    %v512 = vsel %vm510, %v509, 0
    %514 = vmatprep.subr.mxu0 0.0
    %515 = vmatpush1.msra.mxu0 0.0
    %516 = vmatprep.subr.mxu0 0.0
    %517 = vmatpush1.msra.mxu0 0.0
    %518 = vmatprep.subr.mxu0 0.0
    %519 = vmatpush1.msra.mxu0 0.0
    %520 = vmatprep.subr.mxu0 0.0
    %521 = vmatpush1.msra.mxu0 0.0
    %522 = vmatprep.subr.mxu0 0.0
    %523 = vmatpush1.msra.mxu0 0.0
    %524 = vmatprep.subr.mxu0 0.0
    %525 = vmatpush1.msra.mxu0 0.0
    %526 = vmatprep.subr.mxu0 0.0
    %527 = vmatpush1.msra.mxu0 0.0
    %528 = vmatprep.subr.mxu0 0.0
    %529 = vmatpush1.msra.mxu0 0.0
    %530 = vmatprep.subr.mxu0 0.0
    %v531 = vand.u32 %v22, 4294901760
    %532 = vmatpush1.msra.mxu0 %v531
    %533 = vmatprep.subr.mxu0 0.0
    %v534 = vand.u32 %v21, 4294901760
    %535 = vmatpush1.msra.mxu0 %v534
    %536 = vmatprep.subr.mxu0 0.0
    %v537 = vand.u32 %v20, 4294901760
    %538 = vmatpush1.msra.mxu0 %v537
    %539 = vmatprep.subr.mxu0 0.0
    %v540 = vand.u32 %v19, 4294901760
    %541 = vmatpush1.msra.mxu0 %v540
    %542 = vmatprep.subr.mxu0 0.0
    %v543 = vand.u32 %v18, 4294901760
    %544 = vmatpush1.msra.mxu0 %v543
    %545 = vmatprep.subr.mxu0 0.0
    %v546 = vand.u32 %v17, 4294901760
    %547 = vmatpush1.msra.mxu0 %v546
    %548 = vmatprep.subr.mxu0 0.0
    %v549 = vand.u32 %v16, 4294901760
    %550 = vmatpush1.msra.mxu0 %v549
    %551 = vmatprep.subr.mxu0 0.0
    %v552 = vand.u32 %v15, 4294901760
    %553 = vmatpush1.msra.mxu0 %v552
    %554 = vmatprep.subr.mxu0 0.0
    %555 = vmatpush2.msra.mxu0 0.0
    %556 = vmatprep.subr.mxu0 0.0
    %557 = vmatpush2.msra.mxu0 0.0
    %558 = vmatprep.subr.mxu0 0.0
    %559 = vmatpush2.msra.mxu0 0.0
    %560 = vmatprep.subr.mxu0 0.0
    %561 = vmatpush2.msra.mxu0 0.0
    %562 = vmatprep.subr.mxu0 0.0
    %563 = vmatpush2.msra.mxu0 0.0
    %564 = vmatprep.subr.mxu0 0.0
    %565 = vmatpush2.msra.mxu0 0.0
    %566 = vmatprep.subr.mxu0 0.0
    %567 = vmatpush2.msra.mxu0 0.0
    %568 = vmatprep.subr.mxu0 0.0
    %569 = vmatpush2.msra.mxu0 0.0
    %570 = vmatprep.subr.mxu0 0.0
    %571 = vmatpush2.msra.mxu0 0.0
    %572 = vmatprep.subr.mxu0 0.0
    %573 = vmatpush2.msra.mxu0 0.0
    %574 = vmatprep.subr.mxu0 0.0
    %575 = vmatpush2.msra.mxu0 0.0
    %576 = vmatprep.subr.mxu0 0.0
    %577 = vmatpush2.msra.mxu0 0.0
    %578 = vmatprep.subr.mxu0 0.0
    %579 = vmatpush2.msra.mxu0 0.0
    %580 = vmatprep.subr.mxu0 0.0
    %581 = vmatpush2.msra.mxu0 0.0
    %582 = vmatprep.subr.mxu0 0.0
    %583 = vmatpush2.msra.mxu0 0.0
    %584 = vmatprep.subr.mxu0 0.0
    %585 = vmatpush2.msra.mxu0 0.0
    %586 = vmatprep.mubr.f32.mxu0 0.0
    %v587 = vand.u32 %v512, 4294901760
    %v588 = vsub.f32 %v512, %v587
    %v589 = vand.u32 %v588, 4294901760
    %v590 = vsub.f32 %v588, %v589
    %v591 = vand.u32 %v590, 4294901760
    %592 = vmatmul.mubr.f32.gmra.mxu0 %v591
    %v593 = vpop.f32.mrf.mxu0
    %v594 = vadd.f32 0.0, %v593
    %v595 = vpop.f32.mrf.mxu0
    %596 = vdwg.mxu0
    %597 = vmatprep.subr.mxu0 0.0
    %598 = vmatpush1.msra.mxu0 0.0
    %599 = vmatprep.subr.mxu0 0.0
    %600 = vmatpush1.msra.mxu0 0.0
    %601 = vmatprep.subr.mxu0 0.0
    %602 = vmatpush1.msra.mxu0 0.0
    %603 = vmatprep.subr.mxu0 0.0
    %604 = vmatpush1.msra.mxu0 0.0
    %605 = vmatprep.subr.mxu0 0.0
    %606 = vmatpush1.msra.mxu0 0.0
    %607 = vmatprep.subr.mxu0 0.0
    %608 = vmatpush1.msra.mxu0 0.0
    %609 = vmatprep.subr.mxu0 0.0
    %610 = vmatpush1.msra.mxu0 0.0
    %611 = vmatprep.subr.mxu0 0.0
    %612 = vmatpush1.msra.mxu0 0.0
    %613 = vmatprep.subr.mxu0 0.0
    %v614 = vand.u32 %v22, 4294901760
    %v615 = vsub.f32 %v22, %v614
    %v616 = vand.u32 %v615, 4294901760
    %v617 = vsub.f32 %v615, %v616
    %v618 = vand.u32 %v617, 4294901760
    %619 = vmatpush1.msra.mxu0 %v618
    %620 = vmatprep.subr.mxu0 0.0
    %v621 = vand.u32 %v21, 4294901760
    %v622 = vsub.f32 %v21, %v621
    %v623 = vand.u32 %v622, 4294901760
    %v624 = vsub.f32 %v622, %v623
    %v625 = vand.u32 %v624, 4294901760
    %626 = vmatpush1.msra.mxu0 %v625
    %627 = vmatprep.subr.mxu0 0.0
    %v628 = vand.u32 %v20, 4294901760
    %v629 = vsub.f32 %v20, %v628
    %v630 = vand.u32 %v629, 4294901760
    %v631 = vsub.f32 %v629, %v630
    %v632 = vand.u32 %v631, 4294901760
    %633 = vmatpush1.msra.mxu0 %v632
    %634 = vmatprep.subr.mxu0 0.0
    %v635 = vand.u32 %v19, 4294901760
    %v636 = vsub.f32 %v19, %v635
    %v637 = vand.u32 %v636, 4294901760
    %v638 = vsub.f32 %v636, %v637
    %v639 = vand.u32 %v638, 4294901760
    %640 = vmatpush1.msra.mxu0 %v639
    %641 = vmatprep.subr.mxu0 0.0
    %v642 = vand.u32 %v18, 4294901760
    %v643 = vsub.f32 %v18, %v642
    %v644 = vand.u32 %v643, 4294901760
    %v645 = vsub.f32 %v643, %v644
    %v646 = vand.u32 %v645, 4294901760
    %647 = vmatpush1.msra.mxu0 %v646
    %648 = vmatprep.subr.mxu0 0.0
    %v649 = vand.u32 %v17, 4294901760
    %v650 = vsub.f32 %v17, %v649
    %v651 = vand.u32 %v650, 4294901760
    %v652 = vsub.f32 %v650, %v651
    %v653 = vand.u32 %v652, 4294901760
    %654 = vmatpush1.msra.mxu0 %v653
    %655 = vmatprep.subr.mxu0 0.0
    %v656 = vand.u32 %v16, 4294901760
    %v657 = vsub.f32 %v16, %v656
    %v658 = vand.u32 %v657, 4294901760
    %v659 = vsub.f32 %v657, %v658
    %v660 = vand.u32 %v659, 4294901760
    %661 = vmatpush1.msra.mxu0 %v660
    %662 = vmatprep.subr.mxu0 0.0
    %v663 = vand.u32 %v15, 4294901760
    %v664 = vsub.f32 %v15, %v663
    %v665 = vand.u32 %v664, 4294901760
    %v666 = vsub.f32 %v664, %v665
    %v667 = vand.u32 %v666, 4294901760
    %668 = vmatpush1.msra.mxu0 %v667
    %669 = vmatprep.subr.mxu0 0.0
    %670 = vmatpush2.msra.mxu0 0.0
    %671 = vmatprep.subr.mxu0 0.0
    %672 = vmatpush2.msra.mxu0 0.0
    %673 = vmatprep.subr.mxu0 0.0
    %674 = vmatpush2.msra.mxu0 0.0
    %675 = vmatprep.subr.mxu0 0.0
    %676 = vmatpush2.msra.mxu0 0.0
    %677 = vmatprep.subr.mxu0 0.0
    %678 = vmatpush2.msra.mxu0 0.0
    %679 = vmatprep.subr.mxu0 0.0
    %680 = vmatpush2.msra.mxu0 0.0
    %681 = vmatprep.subr.mxu0 0.0
    %682 = vmatpush2.msra.mxu0 0.0
    %683 = vmatprep.subr.mxu0 0.0
    %684 = vmatpush2.msra.mxu0 0.0
    %685 = vmatprep.subr.mxu0 0.0
    %686 = vmatpush2.msra.mxu0 0.0
    %687 = vmatprep.subr.mxu0 0.0
    %688 = vmatpush2.msra.mxu0 0.0
    %689 = vmatprep.subr.mxu0 0.0
    %690 = vmatpush2.msra.mxu0 0.0
    %691 = vmatprep.subr.mxu0 0.0
    %692 = vmatpush2.msra.mxu0 0.0
    %693 = vmatprep.subr.mxu0 0.0
    %694 = vmatpush2.msra.mxu0 0.0
    %695 = vmatprep.subr.mxu0 0.0
    %696 = vmatpush2.msra.mxu0 0.0
    %697 = vmatprep.subr.mxu0 0.0
    %698 = vmatpush2.msra.mxu0 0.0
    %699 = vmatprep.subr.mxu0 0.0
    %700 = vmatpush2.msra.mxu0 0.0
    %701 = vmatprep.mubr.f32.mxu0 0.0
    %v702 = vand.u32 %v512, 4294901760
    %703 = vmatmul.mubr.f32.gmra.mxu0 %v702
    %v704 = vpop.f32.mrf.mxu0
    %v705 = vadd.f32 %v594, %v704
    %v706 = vpop.f32.mrf.mxu0
    %707 = vdwg.mxu0
    %708 = vmatprep.subr.mxu0 0.0
    %709 = vmatpush1.msra.mxu0 0.0
    %710 = vmatprep.subr.mxu0 0.0
    %711 = vmatpush1.msra.mxu0 0.0
    %712 = vmatprep.subr.mxu0 0.0
    %713 = vmatpush1.msra.mxu0 0.0
    %714 = vmatprep.subr.mxu0 0.0
    %715 = vmatpush1.msra.mxu0 0.0
    %716 = vmatprep.subr.mxu0 0.0
    %717 = vmatpush1.msra.mxu0 0.0
    %718 = vmatprep.subr.mxu0 0.0
    %719 = vmatpush1.msra.mxu0 0.0
    %720 = vmatprep.subr.mxu0 0.0
    %721 = vmatpush1.msra.mxu0 0.0
    %722 = vmatprep.subr.mxu0 0.0
    %723 = vmatpush1.msra.mxu0 0.0
    %724 = vmatprep.subr.mxu0 0.0
    %v725 = vand.u32 %v22, 4294901760
    %v726 = vsub.f32 %v22, %v725
    %727 = vmatpush1.msra.mxu0 %v726
    %728 = vmatprep.subr.mxu0 0.0
    %v729 = vand.u32 %v21, 4294901760
    %v730 = vsub.f32 %v21, %v729
    %731 = vmatpush1.msra.mxu0 %v730
    %732 = vmatprep.subr.mxu0 0.0
    %v733 = vand.u32 %v20, 4294901760
    %v734 = vsub.f32 %v20, %v733
    %735 = vmatpush1.msra.mxu0 %v734
    %736 = vmatprep.subr.mxu0 0.0
    %v737 = vand.u32 %v19, 4294901760
    %v738 = vsub.f32 %v19, %v737
    %739 = vmatpush1.msra.mxu0 %v738
    %740 = vmatprep.subr.mxu0 0.0
    %v741 = vand.u32 %v18, 4294901760
    %v742 = vsub.f32 %v18, %v741
    %743 = vmatpush1.msra.mxu0 %v742
    %744 = vmatprep.subr.mxu0 0.0
    %v745 = vand.u32 %v17, 4294901760
    %v746 = vsub.f32 %v17, %v745
    %747 = vmatpush1.msra.mxu0 %v746
    %748 = vmatprep.subr.mxu0 0.0
    %v749 = vand.u32 %v16, 4294901760
    %v750 = vsub.f32 %v16, %v749
    %751 = vmatpush1.msra.mxu0 %v750
    %752 = vmatprep.subr.mxu0 0.0
    %v753 = vand.u32 %v15, 4294901760
    %v754 = vsub.f32 %v15, %v753
    %755 = vmatpush1.msra.mxu0 %v754
    %756 = vmatprep.subr.mxu0 0.0
    %757 = vmatpush2.msra.mxu0 0.0
    %758 = vmatprep.subr.mxu0 0.0
    %759 = vmatpush2.msra.mxu0 0.0
    %760 = vmatprep.subr.mxu0 0.0
    %761 = vmatpush2.msra.mxu0 0.0
    %762 = vmatprep.subr.mxu0 0.0
    %763 = vmatpush2.msra.mxu0 0.0
    %764 = vmatprep.subr.mxu0 0.0
    %765 = vmatpush2.msra.mxu0 0.0
    %766 = vmatprep.subr.mxu0 0.0
    %767 = vmatpush2.msra.mxu0 0.0
    %768 = vmatprep.subr.mxu0 0.0
    %769 = vmatpush2.msra.mxu0 0.0
    %770 = vmatprep.subr.mxu0 0.0
    %771 = vmatpush2.msra.mxu0 0.0
    %772 = vmatprep.subr.mxu0 0.0
    %773 = vmatpush2.msra.mxu0 0.0
    %774 = vmatprep.subr.mxu0 0.0
    %775 = vmatpush2.msra.mxu0 0.0
    %776 = vmatprep.subr.mxu0 0.0
    %777 = vmatpush2.msra.mxu0 0.0
    %778 = vmatprep.subr.mxu0 0.0
    %779 = vmatpush2.msra.mxu0 0.0
    %780 = vmatprep.subr.mxu0 0.0
    %781 = vmatpush2.msra.mxu0 0.0
    %782 = vmatprep.subr.mxu0 0.0
    %783 = vmatpush2.msra.mxu0 0.0
    %784 = vmatprep.subr.mxu0 0.0
    %785 = vmatpush2.msra.mxu0 0.0
    %786 = vmatprep.subr.mxu0 0.0
    %787 = vmatpush2.msra.mxu0 0.0
    %788 = vmatprep.mubr.f32.mxu0 0.0
    %v789 = vand.u32 %v512, 4294901760
    %v790 = vsub.f32 %v512, %v789
    %791 = vmatmul.mubr.f32.gmra.mxu0 %v790
    %v792 = vpop.f32.mrf.mxu0
    %v793 = vadd.f32 %v705, %v792
    %v794 = vpop.f32.mrf.mxu0
    %795 = vdwg.mxu0
    %796 = vmatprep.subr.mxu0 0.0
    %797 = vmatpush1.msra.mxu0 0.0
    %798 = vmatprep.subr.mxu0 0.0
    %799 = vmatpush1.msra.mxu0 0.0
    %800 = vmatprep.subr.mxu0 0.0
    %801 = vmatpush1.msra.mxu0 0.0
    %802 = vmatprep.subr.mxu0 0.0
    %803 = vmatpush1.msra.mxu0 0.0
    %804 = vmatprep.subr.mxu0 0.0
    %805 = vmatpush1.msra.mxu0 0.0
    %806 = vmatprep.subr.mxu0 0.0
    %807 = vmatpush1.msra.mxu0 0.0
    %808 = vmatprep.subr.mxu0 0.0
    %809 = vmatpush1.msra.mxu0 0.0
    %810 = vmatprep.subr.mxu0 0.0
    %811 = vmatpush1.msra.mxu0 0.0
    %812 = vmatprep.subr.mxu0 0.0
    %v813 = vand.u32 %v22, 4294901760
    %814 = vmatpush1.msra.mxu0 %v813
    %815 = vmatprep.subr.mxu0 0.0
    %v816 = vand.u32 %v21, 4294901760
    %817 = vmatpush1.msra.mxu0 %v816
    %818 = vmatprep.subr.mxu0 0.0
    %v819 = vand.u32 %v20, 4294901760
    %820 = vmatpush1.msra.mxu0 %v819
    %821 = vmatprep.subr.mxu0 0.0
    %v822 = vand.u32 %v19, 4294901760
    %823 = vmatpush1.msra.mxu0 %v822
    %824 = vmatprep.subr.mxu0 0.0
    %v825 = vand.u32 %v18, 4294901760
    %826 = vmatpush1.msra.mxu0 %v825
    %827 = vmatprep.subr.mxu0 0.0
    %v828 = vand.u32 %v17, 4294901760
    %829 = vmatpush1.msra.mxu0 %v828
    %830 = vmatprep.subr.mxu0 0.0
    %v831 = vand.u32 %v16, 4294901760
    %832 = vmatpush1.msra.mxu0 %v831
    %833 = vmatprep.subr.mxu0 0.0
    %v834 = vand.u32 %v15, 4294901760
    %835 = vmatpush1.msra.mxu0 %v834
    %836 = vmatprep.subr.mxu0 0.0
    %837 = vmatpush2.msra.mxu0 0.0
    %838 = vmatprep.subr.mxu0 0.0
    %839 = vmatpush2.msra.mxu0 0.0
    %840 = vmatprep.subr.mxu0 0.0
    %841 = vmatpush2.msra.mxu0 0.0
    %842 = vmatprep.subr.mxu0 0.0
    %843 = vmatpush2.msra.mxu0 0.0
    %844 = vmatprep.subr.mxu0 0.0
    %845 = vmatpush2.msra.mxu0 0.0
    %846 = vmatprep.subr.mxu0 0.0
    %847 = vmatpush2.msra.mxu0 0.0
    %848 = vmatprep.subr.mxu0 0.0
    %849 = vmatpush2.msra.mxu0 0.0
    %850 = vmatprep.subr.mxu0 0.0
    %851 = vmatpush2.msra.mxu0 0.0
    %852 = vmatprep.subr.mxu0 0.0
    %853 = vmatpush2.msra.mxu0 0.0
    %854 = vmatprep.subr.mxu0 0.0
    %855 = vmatpush2.msra.mxu0 0.0
    %856 = vmatprep.subr.mxu0 0.0
    %857 = vmatpush2.msra.mxu0 0.0
    %858 = vmatprep.subr.mxu0 0.0
    %859 = vmatpush2.msra.mxu0 0.0
    %860 = vmatprep.subr.mxu0 0.0
    %861 = vmatpush2.msra.mxu0 0.0
    %862 = vmatprep.subr.mxu0 0.0
    %863 = vmatpush2.msra.mxu0 0.0
    %864 = vmatprep.subr.mxu0 0.0
    %865 = vmatpush2.msra.mxu0 0.0
    %866 = vmatprep.subr.mxu0 0.0
    %867 = vmatpush2.msra.mxu0 0.0
    %868 = vmatprep.mubr.f32.mxu0 0.0
    %v869 = vand.u32 %v512, 4294901760
    %v870 = vsub.f32 %v512, %v869
    %v871 = vand.u32 %v870, 4294901760
    %872 = vmatmul.mubr.f32.gmra.mxu0 %v871
    %v873 = vpop.f32.mrf.mxu0
    %v874 = vadd.f32 %v793, %v873
    %v875 = vpop.f32.mrf.mxu0
    %876 = vdwg.mxu0
    %877 = vmatprep.subr.mxu0 0.0
    %878 = vmatpush1.msra.mxu0 0.0
    %879 = vmatprep.subr.mxu0 0.0
    %880 = vmatpush1.msra.mxu0 0.0
    %881 = vmatprep.subr.mxu0 0.0
    %882 = vmatpush1.msra.mxu0 0.0
    %883 = vmatprep.subr.mxu0 0.0
    %884 = vmatpush1.msra.mxu0 0.0
    %885 = vmatprep.subr.mxu0 0.0
    %886 = vmatpush1.msra.mxu0 0.0
    %887 = vmatprep.subr.mxu0 0.0
    %888 = vmatpush1.msra.mxu0 0.0
    %889 = vmatprep.subr.mxu0 0.0
    %890 = vmatpush1.msra.mxu0 0.0
    %891 = vmatprep.subr.mxu0 0.0
    %892 = vmatpush1.msra.mxu0 0.0
    %893 = vmatprep.subr.mxu0 0.0
    %v894 = vand.u32 %v22, 4294901760
    %v895 = vsub.f32 %v22, %v894
    %v896 = vand.u32 %v895, 4294901760
    %897 = vmatpush1.msra.mxu0 %v896
    %898 = vmatprep.subr.mxu0 0.0
    %v899 = vand.u32 %v21, 4294901760
    %v900 = vsub.f32 %v21, %v899
    %v901 = vand.u32 %v900, 4294901760
    %902 = vmatpush1.msra.mxu0 %v901
    %903 = vmatprep.subr.mxu0 0.0
    %v904 = vand.u32 %v20, 4294901760
    %v905 = vsub.f32 %v20, %v904
    %v906 = vand.u32 %v905, 4294901760
    %907 = vmatpush1.msra.mxu0 %v906
    %908 = vmatprep.subr.mxu0 0.0
    %v909 = vand.u32 %v19, 4294901760
    %v910 = vsub.f32 %v19, %v909
    %v911 = vand.u32 %v910, 4294901760
    %912 = vmatpush1.msra.mxu0 %v911
    %913 = vmatprep.subr.mxu0 0.0
    %v914 = vand.u32 %v18, 4294901760
    %v915 = vsub.f32 %v18, %v914
    %v916 = vand.u32 %v915, 4294901760
    %917 = vmatpush1.msra.mxu0 %v916
    %918 = vmatprep.subr.mxu0 0.0
    %v919 = vand.u32 %v17, 4294901760
    %v920 = vsub.f32 %v17, %v919
    %v921 = vand.u32 %v920, 4294901760
    %922 = vmatpush1.msra.mxu0 %v921
    %923 = vmatprep.subr.mxu0 0.0
    %v924 = vand.u32 %v16, 4294901760
    %v925 = vsub.f32 %v16, %v924
    %v926 = vand.u32 %v925, 4294901760
    %927 = vmatpush1.msra.mxu0 %v926
    %928 = vmatprep.subr.mxu0 0.0
    %v929 = vand.u32 %v15, 4294901760
    %v930 = vsub.f32 %v15, %v929
    %v931 = vand.u32 %v930, 4294901760
    %932 = vmatpush1.msra.mxu0 %v931
    %933 = vmatprep.subr.mxu0 0.0
    %934 = vmatpush2.msra.mxu0 0.0
    %935 = vmatprep.subr.mxu0 0.0
    %936 = vmatpush2.msra.mxu0 0.0
    %937 = vmatprep.subr.mxu0 0.0
    %938 = vmatpush2.msra.mxu0 0.0
    %939 = vmatprep.subr.mxu0 0.0
    %940 = vmatpush2.msra.mxu0 0.0
    %941 = vmatprep.subr.mxu0 0.0
    %942 = vmatpush2.msra.mxu0 0.0
    %943 = vmatprep.subr.mxu0 0.0
    %944 = vmatpush2.msra.mxu0 0.0
    %945 = vmatprep.subr.mxu0 0.0
    %946 = vmatpush2.msra.mxu0 0.0
    %947 = vmatprep.subr.mxu0 0.0
    %948 = vmatpush2.msra.mxu0 0.0
    %949 = vmatprep.subr.mxu0 0.0
    %950 = vmatpush2.msra.mxu0 0.0
    %951 = vmatprep.subr.mxu0 0.0
    %952 = vmatpush2.msra.mxu0 0.0
    %953 = vmatprep.subr.mxu0 0.0
    %954 = vmatpush2.msra.mxu0 0.0
    %955 = vmatprep.subr.mxu0 0.0
    %956 = vmatpush2.msra.mxu0 0.0
    %957 = vmatprep.subr.mxu0 0.0
    %958 = vmatpush2.msra.mxu0 0.0
    %959 = vmatprep.subr.mxu0 0.0
    %960 = vmatpush2.msra.mxu0 0.0
    %961 = vmatprep.subr.mxu0 0.0
    %962 = vmatpush2.msra.mxu0 0.0
    %963 = vmatprep.subr.mxu0 0.0
    %964 = vmatpush2.msra.mxu0 0.0
    %965 = vmatprep.mubr.f32.mxu0 0.0
    %v966 = vand.u32 %v512, 4294901760
    %967 = vmatmul.mubr.f32.gmra.mxu0 %v966
    %v968 = vpop.f32.mrf.mxu0
    %v969 = vadd.f32 %v874, %v968
    %v970 = vpop.f32.mrf.mxu0
    %971 = vdwg.mxu0
    %972 = vmatprep.subr.mxu0 0.0
    %973 = vmatpush1.msra.mxu0 0.0
    %974 = vmatprep.subr.mxu0 0.0
    %975 = vmatpush1.msra.mxu0 0.0
    %976 = vmatprep.subr.mxu0 0.0
    %977 = vmatpush1.msra.mxu0 0.0
    %978 = vmatprep.subr.mxu0 0.0
    %979 = vmatpush1.msra.mxu0 0.0
    %980 = vmatprep.subr.mxu0 0.0
    %981 = vmatpush1.msra.mxu0 0.0
    %982 = vmatprep.subr.mxu0 0.0
    %983 = vmatpush1.msra.mxu0 0.0
    %984 = vmatprep.subr.mxu0 0.0
    %985 = vmatpush1.msra.mxu0 0.0
    %986 = vmatprep.subr.mxu0 0.0
    %987 = vmatpush1.msra.mxu0 0.0
    %988 = vmatprep.subr.mxu0 0.0
    %v989 = vand.u32 %v22, 4294901760
    %990 = vmatpush1.msra.mxu0 %v989
    %991 = vmatprep.subr.mxu0 0.0
    %v992 = vand.u32 %v21, 4294901760
    %993 = vmatpush1.msra.mxu0 %v992
    %994 = vmatprep.subr.mxu0 0.0
    %v995 = vand.u32 %v20, 4294901760
    %996 = vmatpush1.msra.mxu0 %v995
    %997 = vmatprep.subr.mxu0 0.0
    %v998 = vand.u32 %v19, 4294901760
    %999 = vmatpush1.msra.mxu0 %v998
    %1000 = vmatprep.subr.mxu0 0.0
    %v1001 = vand.u32 %v18, 4294901760
    %1002 = vmatpush1.msra.mxu0 %v1001
    %1003 = vmatprep.subr.mxu0 0.0
    %v1004 = vand.u32 %v17, 4294901760
    %1005 = vmatpush1.msra.mxu0 %v1004
    %1006 = vmatprep.subr.mxu0 0.0
    %v1007 = vand.u32 %v16, 4294901760
    %1008 = vmatpush1.msra.mxu0 %v1007
    %1009 = vmatprep.subr.mxu0 0.0
    %v1010 = vand.u32 %v15, 4294901760
    %1011 = vmatpush1.msra.mxu0 %v1010
    %1012 = vmatprep.subr.mxu0 0.0
    %1013 = vmatpush2.msra.mxu0 0.0
    %1014 = vmatprep.subr.mxu0 0.0
    %1015 = vmatpush2.msra.mxu0 0.0
    %1016 = vmatprep.subr.mxu0 0.0
    %1017 = vmatpush2.msra.mxu0 0.0
    %1018 = vmatprep.subr.mxu0 0.0
    %1019 = vmatpush2.msra.mxu0 0.0
    %1020 = vmatprep.subr.mxu0 0.0
    %1021 = vmatpush2.msra.mxu0 0.0
    %1022 = vmatprep.subr.mxu0 0.0
    %1023 = vmatpush2.msra.mxu0 0.0
    %1024 = vmatprep.subr.mxu0 0.0
    %1025 = vmatpush2.msra.mxu0 0.0
    %1026 = vmatprep.subr.mxu0 0.0
    %1027 = vmatpush2.msra.mxu0 0.0
    %1028 = vmatprep.subr.mxu0 0.0
    %1029 = vmatpush2.msra.mxu0 0.0
    %1030 = vmatprep.subr.mxu0 0.0
    %1031 = vmatpush2.msra.mxu0 0.0
    %1032 = vmatprep.subr.mxu0 0.0
    %1033 = vmatpush2.msra.mxu0 0.0
    %1034 = vmatprep.subr.mxu0 0.0
    %1035 = vmatpush2.msra.mxu0 0.0
    %1036 = vmatprep.subr.mxu0 0.0
    %1037 = vmatpush2.msra.mxu0 0.0
    %1038 = vmatprep.subr.mxu0 0.0
    %1039 = vmatpush2.msra.mxu0 0.0
    %1040 = vmatprep.subr.mxu0 0.0
    %1041 = vmatpush2.msra.mxu0 0.0
    %1042 = vmatprep.subr.mxu0 0.0
    %1043 = vmatpush2.msra.mxu0 0.0
    %1044 = vmatprep.mubr.f32.mxu0 0.0
    %v1045 = vand.u32 %v512, 4294901760
    %1046 = vmatmul.mubr.f32.gmra.mxu0 %v1045
    %v1047 = vpop.f32.mrf.mxu0
    %v1048 = vadd.f32 %v969, %v1047
    %v1049 = vpop.f32.mrf.mxu0
    %1050 = vdwg.mxu0
    %v1051 = vmax.f32 %v499, -40.0
    %v1052 = vtanh.pop %v1051
    %v1053 = vlaneseq
    %v1054 = vshrl.u32 %v1053, 7
    %v1055 = vsub.s32 0, %v1054
    %v1056 = vrot.slane %v1052, %v1055
    %1058 = vbcast.lane.b32.xlu0 %v1056, 256
    %v1059 = vpop.permute.xlu0 %1058
    %v1060 = vmul.f32 %v1048, %v1059
    %1061 = vst.msk [vmem:[#allocation2] sm:$0xff] %vm39, %v1060
    // Predicated region
    $region14: #{topk_forward_batched.1} parent=1 // pred_check
      _
    $region15: #{topk_forward_batched.1} parent=1 // pred_check_branch
      %1063 = sbr.rel (0) target = $region17
    $region16: #{topk_forward_batched.1} parent=1 // pred_region
      %s1065 = ssub.s32 128, 128
      %1066 = vsyncadd [#allocation3], %s1065
      %s1068 = sshll.u32 [#allocation2], 4
      %s1069 = int_to_ptr.vmem [resolvable:$true] %s1068
      %1071 = dma.vmem_to_hbm [thread:$0]  %s1069, 128, %s3, [#allocation3]
    $region17: #{topk_forward_batched.1} parent=1 // pred_fallthru
      _
    // Predicated region
    $region18: #{topk_forward_batched.1} parent=1 // pred_check
      _
    $region19: #{topk_forward_batched.1} parent=1 // pred_check_branch
      %1073 = sbr.rel (0) target = $region21
    $region20: #{topk_forward_batched.1} parent=1 // pred_region
      %1074 = dma.done [#allocation3], 128
    $region21: #{topk_forward_batched.1} parent=1 // pred_fallthru
      _
    %1075 = vsyncpa [#allocation3], 1

</llo_original>
